<compile_context>
chip_gen: v7x
topology: tpu7x:2x2x1
jax: 0.10.0
libtpu: 0.0.40
codegen_flags: <defaults>
</compile_context>

<pallas_src>
import functools

import jax
import jax.numpy as jnp
from jax import lax
from jax.experimental import pallas as pl
from jax.experimental.pallas import tpu as pltpu


def _round_up(x, m):
    return -(-x // m) * m


# ---------------------------------------------------------------------------
# Capability probes (run once at import, tiny kernels, fully guarded).
#  * _TAKE_GATHER_OK    : does an in-kernel row gather (jnp.take) lower?
#  * _BUFFERED_SINGLE_OK: is pipeline_mode=pl.Buffered(1) accepted?
# ---------------------------------------------------------------------------
def _probe_take_gather() -> bool:
    try:
        def k(tab_ref, idx_ref, o_ref):
            o_ref[...] = jnp.take(tab_ref[...], idx_ref[...][:, 0], axis=0,
                                  mode="clip")

        f = pl.pallas_call(
            k, out_shape=jax.ShapeDtypeStruct((16, 128), jnp.float32))
        tab = jnp.arange(64 * 128, dtype=jnp.float32).reshape(64, 128)
        idx = (jnp.arange(16, dtype=jnp.int32) * 7 + 3) % 64
        out = jax.block_until_ready(f(tab, idx.reshape(16, 1)))
        return bool(jnp.array_equal(out, tab[idx]))
    except Exception:
        return False


def _probe_buffered_single() -> bool:
    try:
        def k(x_ref, o_ref):
            o_ref[...] = x_ref[...] + 1.0

        f = pl.pallas_call(
            k,
            out_shape=jax.ShapeDtypeStruct((8, 128), jnp.float32),
            grid=(1,),
            in_specs=[pl.BlockSpec((8, 128), lambda i: (0, 0),
                                   pipeline_mode=pl.Buffered(1))],
            out_specs=pl.BlockSpec((8, 128), lambda i: (0, 0)),
        )
        out = jax.block_until_ready(f(jnp.zeros((8, 128), jnp.float32)))
        return bool(jnp.allclose(out, 1.0))
    except Exception:
        return False


_TAKE_GATHER_OK = _probe_take_gather()
_BUFFERED_SINGLE_OK = _probe_buffered_single()


def _vmem_capacity_bytes() -> int:
    try:
        cap = getattr(pltpu.get_tpu_info(), "vmem_capacity_bytes", None)
        if cap:
            return int(cap)
    except Exception:
        pass
    return 64 * 1024 * 1024  # conservative default (v7x per-core VMEM)


# ---------------------------------------------------------------------------
# Resident-table kernels: both tables live in VMEM (fetched once, constant
# index_map), T token ids per grid step, dense lane-dense (T, D) output tile.
# ---------------------------------------------------------------------------
_MAX_SELECT_ROWS = 32  # tiny prefix table handled with unrolled selects


def _take_gather_kernel(ids_ref, base_ref, new_ref, o_ref, *, n_base):
    """Preferred lowering: true row gather, O(T*D), no MXU, exact."""
    ids2 = ids_ref[...]                            # (T, 1) int32
    in_new = ids2 >= n_base                        # (T, 1) bool
    base_idx = jnp.where(in_new, 0, ids2)[:, 0]    # (T,) always in-range
    out = jnp.take(base_ref[...], base_idx, axis=0, mode="clip")  # (T, D)

    vn = new_ref.shape[0]
    if vn <= _MAX_SELECT_ROWS:
        # tiny prefix table: a few masked selects instead of a second gather
        new_pos = ids2 - n_base                    # (T, 1)
        for j in range(vn):
            out = jnp.where(new_pos == j, new_ref[j, :][None, :], out)
    else:
        new_idx = jnp.where(in_new, ids2 - n_base, 0)[:, 0]
        new_rows = jnp.take(new_ref[...], new_idx, axis=0, mode="clip")
        out = jnp.where(in_new, new_rows, out)
    o_ref[...] = out.astype(o_ref.dtype)


def _onehot_gather_kernel(ids_ref, base_ref, new_ref, o_ref, *, n_base):
    """Fallback lowering (used only when the true gather is unavailable):
    one-hot matmul on the MXU in the table's NATIVE dtype (no per-step f32
    upcast of the table).  For f32 tables precision=HIGHEST is kept so the
    gather stays exact; bf16 tables use a single default-precision pass."""
    ids2 = ids_ref[...]                            # (T, 1) int32
    t = ids2.shape[0]
    vb = base_ref.shape[0]
    vn = new_ref.shape[0]
    tdt = base_ref.dtype
    prec = (lax.Precision.HIGHEST
            if tdt == jnp.dtype(jnp.float32) else None)

    oh = (lax.broadcasted_iota(jnp.int32, (t, vb), 1) == ids2).astype(tdt)
    acc = jnp.dot(oh, base_ref[...],
                  preferred_element_type=jnp.float32, precision=prec)

    if vn <= _MAX_SELECT_ROWS:
        # no second (K=vn) matmul: handle the tiny prefix table with selects
        new_pos = ids2 - n_base
        for j in range(vn):
            acc = jnp.where(new_pos == j,
                            new_ref[j, :][None, :].astype(jnp.float32), acc)
    else:
        oh_n = (lax.broadcasted_iota(jnp.int32, (t, vn), 1)
                == (ids2 - n_base)).astype(tdt)
        acc = acc + jnp.dot(oh_n, new_ref[...],
                            preferred_element_type=jnp.float32, precision=prec)
    o_ref[...] = acc.astype(o_ref.dtype)


def _resident_lookup(ids2d, base, new, *, n_base, tile):
    n_pad = ids2d.shape[0]
    vb, d = base.shape
    vn = new.shape[0]
    dtype = base.dtype
    itemsize = jnp.dtype(dtype).itemsize

    use_take = (_TAKE_GATHER_OK and vb % 8 == 0
                and (vn <= _MAX_SELECT_ROWS or vn % 8 == 0))
    if use_take:
        kernel = functools.partial(_take_gather_kernel, n_base=n_base)
        flops = 4 * n_pad * d                        # routing / selects only
    else:
        kernel = functools.partial(_onehot_gather_kernel, n_base=n_base)
        flops = 2 * n_pad * vb * d + 3 * n_pad * vb  # matmul + one-hot build

    # Constant-index-map tables are fetched exactly once -> single-buffer them
    # when supported (halves their VMEM footprint).
    table_kwargs = (dict(pipeline_mode=pl.Buffered(1))
                    if _BUFFERED_SINGLE_OK else {})
    buf_factor = 1 if _BUFFERED_SINGLE_OK else 2

    table_bytes = (vb + vn) * d * itemsize
    need = (table_bytes * buf_factor               # resident tables
            + 2 * tile * d * itemsize              # double-buffered out tiles
            + 2 * tile * 4                         # double-buffered id tiles
            + (1 << 20))                           # compiler scratch slack
    vmem_limit = int(min(max(need * 5 // 4, 32 * 1024 * 1024),
                         int(0.95 * _vmem_capacity_bytes())))

    cost = pl.CostEstimate(
        flops=int(flops), transcendentals=0,
        bytes_accessed=int(table_bytes + n_pad * d * itemsize + n_pad * 4))

    return pl.pallas_call(
        kernel,
        out_shape=jax.ShapeDtypeStruct((n_pad, d), dtype),
        grid_spec=pltpu.PrefetchScalarGridSpec(
            num_scalar_prefetch=0,
            grid=(n_pad // tile,),
            in_specs=[
                # (tile, 1) tile of token ids for this grid step
                pl.BlockSpec((tile, 1), lambda i: (i, 0)),
                # full tables, constant index_map -> resident in VMEM
                pl.BlockSpec((vb, d), lambda i: (0, 0), **table_kwargs),
                pl.BlockSpec((vn, d), lambda i: (0, 0), **table_kwargs),
            ],
            # dense lane-dense (tile, D) output tile
            out_specs=pl.BlockSpec((tile, d), lambda i: (i, 0)),
        ),
        compiler_params=pltpu.CompilerParams(
            # independent token tiles -> megacore sharding on v7x (each core
            # then holds its own copy of both resident tables)
            dimension_semantics=("parallel",),
            vmem_limit_bytes=vmem_limit,
        ),
        cost_estimate=cost,
    )(ids2d, base, new)


# ---------------------------------------------------------------------------
# Large-vocabulary fallback: tables stay in HBM, requested rows are streamed.
# Token ids are scalar-prefetched into SMEM and drive Element-indexed
# BlockSpecs, so Pallas emits the double-buffered per-row async copies (same
# structure as a hand-rolled pl.ANY + make_async_copy loop).  Traffic is
# O(T*D) instead of O(V*D) residency.
# TODO(synk): batch several rows per grid step ((8, D) output blocks) to
# amortize the per-step overhead; one row per step is already the correct
# asymptotic regime for huge vocabularies (and the only regime on v5e/v7x for
# tables that do not fit VMEM).
# ---------------------------------------------------------------------------
def _streamed_row_kernel(ids_smem, base_row_ref, new_row_ref, o_ref, *, n_base):
    idx = ids_smem[pl.program_id(0)]
    o_ref[...] = jnp.where(idx < n_base, base_row_ref[...], new_row_ref[...])


def _streamed_lookup(ids_flat, base, new, *, n_base):
    n_tok = ids_flat.shape[0]
    vb, d = base.shape
    vn = new.shape[0]
    dtype = base.dtype
    itemsize = jnp.dtype(dtype).itemsize

    def base_map(i, ids):
        idx = ids[i]
        return (jnp.where(idx < n_base, jnp.clip(idx, 0, vb - 1), 0), 0)

    def new_map(i, ids):
        return (jnp.clip(ids[i] - n_base, 0, vn - 1), 0)

    cost = pl.CostEstimate(
        flops=int(n_tok * d), transcendentals=0,
        bytes_accessed=int(3 * n_tok * d * itemsize + n_tok * 4))

    return pl.pallas_call(
        functools.partial(_streamed_row_kernel, n_base=n_base),
        out_shape=jax.ShapeDtypeStruct((n_tok, d), dtype),
        grid_spec=pltpu.PrefetchScalarGridSpec(
            num_scalar_prefetch=1,
            grid=(n_tok,),
            in_specs=[
                pl.BlockSpec((pl.Element(1), d), base_map),
                pl.BlockSpec((pl.Element(1), d), new_map),
            ],
            out_specs=pl.BlockSpec((1, d), lambda i, ids: (i, 0)),
        ),
        compiler_params=pltpu.CompilerParams(
            dimension_semantics=("arbitrary",),
        ),
        cost_estimate=cost,
    )(ids_flat, base, new)


# ---------------------------------------------------------------------------
# Public wrapper
# ---------------------------------------------------------------------------
@functools.partial(jax.jit, static_argnames=("tile_tokens", "force_path"))
def embedding_lookup(indices, base_table, new_table, *, tile_tokens=256,
                     force_path=None):
    """out = concat([base_table, new_table], 0)[indices] without materializing
    the concatenated table in HBM.

    Paths:
      * resident : tables live in VMEM, `tile_tokens` ids per grid step
                   (prompt-tuning-sized tables).
      * streamed : tables stay in HBM; rows streamed via double-buffered
                   per-row DMAs (large vocabularies / v7x's 64 MiB VMEM).
    Out-of-range / negative ids are clamped (torch would raise).
    """
    in_shape = indices.shape
    vb, d = base_table.shape
    vn = new_table.shape[0]
    dtype = base_table.dtype
    itemsize = jnp.dtype(dtype).itemsize

    flat = indices.reshape(-1).astype(jnp.int32)
    n_tok = flat.shape[0]

    # Token-tile size: multiple of 8, amortizes per-grid-step overhead, but do
    # not pad tiny inputs up to a huge tile.
    tile = min(int(tile_tokens), _round_up(n_tok, 8))
    tile = max(8, _round_up(tile, 8))

    # Size guard: resident tables only when they comfortably fit per-core VMEM
    # (~70%); otherwise stream rows from HBM.
    buf_factor = 1 if _BUFFERED_SINGLE_OK else 2
    footprint = ((vb + vn) * d * itemsize * buf_factor
                 + 2 * tile * d * itemsize + 2 * tile * 4)
    resident_fits = footprint <= int(0.7 * _vmem_capacity_bytes())

    if force_path == "resident":
        use_resident = True
    elif force_path == "streamed":
        use_resident = False
    else:
        use_resident = resident_fits

    if use_resident:
        n_pad = _round_up(n_tok, tile)
        if n_pad != n_tok:
            flat = jnp.pad(flat, (0, n_pad - n_tok))   # pad ids with 0
        out = _resident_lookup(flat.reshape(n_pad, 1), base_table, new_table,
                               n_base=vb, tile=tile)
    else:
        out = _streamed_lookup(flat, base_table, new_table, n_base=vb)

    return out[:n_tok].reshape(*in_shape, d)


def make_my_embedding_params(key, vocab_size, embed_dim, n_prefix, n_class):
    """Deterministic synthetic parameters mirroring MyEmbedding.__init__."""
    k_w, k_perm = jax.random.split(key)
    embed_weight = jax.random.normal(k_w, (vocab_size, embed_dim), jnp.float32)
    n_new = n_prefix * n_class
    perm = jax.random.permutation(k_perm, vocab_size)[:n_new]
    new_embed_weight = embed_weight[perm]
    return embed_weight, new_embed_weight


def my_embedding_forward(indices, embed_weight, new_embed_weight):
    # ids >= vocab_size are routed to the new (prefix) table inside the kernel
    return embedding_lookup(indices, embed_weight, new_embed_weight)


if __name__ == "__main__":
    key = jax.random.PRNGKey(0)
    k_param, k_idx = jax.random.split(key)

    # small, forward-consistent shapes
    vocab_size = 64
    embed_dim = 128
    n_prefix = 2
    n_class = 3
    batch, seq = 2, 8

    embed_w, new_embed_w = make_my_embedding_params(
        k_param, vocab_size, embed_dim, n_prefix, n_class)

    n_new = n_prefix * n_class
    total_rows = vocab_size + n_new
    indices = jax.random.randint(
        k_idx, (batch, seq), minval=0, maxval=total_rows, dtype=jnp.int32)
    # guarantee every new-table (prefix) row is exercised
    indices = indices.at[0, :n_new].set(
        vocab_size + jnp.arange(n_new, dtype=jnp.int32))

    ref = jnp.concatenate([embed_w, new_embed_w], axis=0)[indices]

    # default path (resident tables for these prompt-tuning-sized shapes)
    out = jax.block_until_ready(
        my_embedding_forward(indices, embed_w, new_embed_w))
    assert out.shape == (batch, seq, embed_dim)
    assert jnp.allclose(out, ref, atol=1e-5, rtol=1e-5), (
        "Pallas resident-path gather mismatch vs reference")

    # explicitly exercise the large-vocabulary streaming fallback as well
    out_s = jax.block_until_ready(
        embedding_lookup(indices, embed_w, new_embed_w, force_path="streamed"))
    assert jnp.allclose(out_s, ref, atol=1e-5, rtol=1e-5), (
        "Pallas streamed-path gather mismatch vs reference")

    print("KERNEL_OK")
</pallas_src>

<mosaic_0001>
module attributes {stable_mosaic.version = 11 : i64} {
  func.func @k(%arg0: i32, %arg1: memref<8x128xf32, #tpu.memory_space<vmem>>, %arg2: memref<8x128xf32, #tpu.memory_space<vmem>>) attributes {dimension_semantics = [#tpu.dimension_semantics<arbitrary>], iteration_bounds = array<i64: 1>, scalar_prefetch = 0 : i64, scratch_operands = 0 : i64, tpu.core_type = #tpu.core_type<tc>, window_params = [{pipeline_mode = #tpu.pipeline_mode<synchronous>, transform_indices = @transform_0, window_bounds = array<i64: 8, 128>}, {pipeline_mode = #tpu.pipeline_mode<synchronous>, transform_indices = @transform_1, window_bounds = array<i64: 8, 128>}]} {
    %c0 = arith.constant 0 : index
    %c0_0 = arith.constant 0 : index
    %0 = vector.load %arg1[%c0, %c0_0] : memref<8x128xf32, #tpu.memory_space<vmem>>, vector<8x128xf32>
    %cst = arith.constant 1.000000e+00 : f32
    %1 = vector.broadcast %cst : f32 to vector<8x128xf32>
    %2 = arith.addf %0, %1 : vector<8x128xf32>
    %c0_1 = arith.constant 0 : index
    %c0_2 = arith.constant 0 : index
    %3 = vector.load %arg2[%c0_1, %c0_2] : memref<8x128xf32, #tpu.memory_space<vmem>>, vector<8x128xf32>
    tpu.vector_store %arg2[%c0_1, %c0_2], %2 {strides = array<i32>} : memref<8x128xf32, #tpu.memory_space<vmem>>, vector<8x128xf32>,
    return
  }
  func.func @transform_0(%arg0: i32) -> (i32, i32) {
    %c0_i32 = arith.constant 0 : i32
    %c0_i32_0 = arith.constant 0 : i32
    %c0_i32_1 = arith.constant 0 : i32
    return %c0_i32, %c0_i32_0 : i32, i32
  }
  func.func @transform_1(%arg0: i32) -> (i32, i32) {
    %c0_i32 = arith.constant 0 : i32
    %c0_i32_0 = arith.constant 0 : i32
    %c0_i32_1 = arith.constant 0 : i32
    return %c0_i32, %c0_i32_0 : i32, i32
  }
}

module attributes {stable_mosaic.version = 11 : i64} {
  func.func @_onehot_gather_kernel(%arg0: i32, %arg1: memref<16x1xi32, #tpu.memory_space<vmem>>, %arg2: memref<64x128xf32, #tpu.memory_space<vmem>>, %arg3: memref<6x128xf32, #tpu.memory_space<vmem>>, %arg4: memref<16x128xf32, #tpu.memory_space<vmem>>) attributes {dimension_semantics = [#tpu.dimension_semantics<parallel>], iteration_bounds = array<i64: 1>, scalar_prefetch = 0 : i64, scratch_operands = 0 : i64, tpu.core_type = #tpu.core_type<tc>, window_params = [{transform_indices = @transform_0, window_bounds = array<i64: 16, 1>}, {pipeline_mode = #tpu.pipeline_mode<synchronous>, transform_indices = @transform_1, window_bounds = array<i64: 64, 128>}, {pipeline_mode = #tpu.pipeline_mode<synchronous>, transform_indices = @transform_2, window_bounds = array<i64: 6, 128>}, {transform_indices = @transform_3, window_bounds = array<i64: 16, 128>}]} {
    %c0 = arith.constant 0 : index
    %c0_0 = arith.constant 0 : index
    %0 = vector.load %arg1[%c0, %c0_0] : memref<16x1xi32, #tpu.memory_space<vmem>>, vector<16x1xi32>
    %1 = tpu.iota {dimensions = array<i32: 1>} : vector<16x64xi32>
    %2 = vector.broadcast %0 : vector<16x1xi32> to vector<16x64xi32>
    %3 = arith.cmpi eq, %1, %2 : vector<16x64xi32>
    %4 = arith.extui %3 : vector<16x64xi1> to vector<16x64xi32>
    %5 = arith.sitofp %4 : vector<16x64xi32> to vector<16x64xf32>
    %c0_1 = arith.constant 0 : index
    %c0_2 = arith.constant 0 : index
    %6 = vector.load %arg2[%c0_1, %c0_2] : memref<64x128xf32, #tpu.memory_space<vmem>>, vector<64x128xf32>
    %cst = arith.constant dense<0.000000e+00> : vector<16x128xf32>
    %7 = tpu.matmul %5, %6, %cst {dimension_numbers = #tpu.dot_dimension_numbers<[1], [0], [0], [1], [0, 0, 1, 1], [], []>, precision = #tpu.contract_precision<fp32>} : vector<16x64xf32>, vector<64x128xf32>, vector<16x128xf32> -> vector<16x128xf32>
    %c64_i32 = arith.constant 64 : i32
    %8 = vector.broadcast %c64_i32 : i32 to vector<16x1xi32>
    %9 = arith.subi %0, %8 : vector<16x1xi32>
    %c0_i32 = arith.constant 0 : i32
    %10 = vector.broadcast %c0_i32 : i32 to vector<16x1xi32>
    %11 = arith.cmpi eq, %9, %10 : vector<16x1xi32>
    %c0_3 = arith.constant 0 : index
    %c0_4 = arith.constant 0 : index
    %12 = vector.load %arg3[%c0_3, %c0_4] : memref<6x128xf32, #tpu.memory_space<vmem>>, vector<1x128xf32>
    %13 = vector.shape_cast %12 : vector<1x128xf32> to vector<128xf32>
    %14 = vector.shape_cast %13 : vector<128xf32> to vector<1x128xf32>
    %15 = vector.shape_cast %11 : vector<16x1xi1> to vector<16x1xi1>
    %16 = vector.broadcast %15 : vector<16x1xi1> to vector<16x128xi1>
    %17 = vector.shape_cast %14 : vector<1x128xf32> to vector<1x128xf32>
    %18 = vector.broadcast %17 : vector<1x128xf32> to vector<16x128xf32>
    %19 = arith.select %16, %18, %7 : vector<16x128xi1>, vector<16x128xf32>
    %c1_i32 = arith.constant 1 : i32
    %20 = vector.broadcast %c1_i32 : i32 to vector<16x1xi32>
    %21 = arith.cmpi eq, %9, %20 : vector<16x1xi32>
    %c1 = arith.constant 1 : index
    %c0_5 = arith.constant 0 : index
    %22 = vector.load %arg3[%c1, %c0_5] : memref<6x128xf32, #tpu.memory_space<vmem>>, vector<1x128xf32>
    %23 = vector.shape_cast %22 : vector<1x128xf32> to vector<128xf32>
    %24 = vector.shape_cast %23 : vector<128xf32> to vector<1x128xf32>
    %25 = vector.shape_cast %21 : vector<16x1xi1> to vector<16x1xi1>
    %26 = vector.broadcast %25 : vector<16x1xi1> to vector<16x128xi1>
    %27 = vector.shape_cast %24 : vector<1x128xf32> to vector<1x128xf32>
    %28 = vector.broadcast %27 : vector<1x128xf32> to vector<16x128xf32>
    %29 = arith.select %26, %28, %19 : vector<16x128xi1>, vector<16x128xf32>
    %c2_i32 = arith.constant 2 : i32
    %30 = vector.broadcast %c2_i32 : i32 to vector<16x1xi32>
    %31 = arith.cmpi eq, %9, %30 : vector<16x1xi32>
    %c2 = arith.constant 2 : index
    %c0_6 = arith.constant 0 : index
    %32 = vector.load %arg3[%c2, %c0_6] : memref<6x128xf32, #tpu.memory_space<vmem>>, vector<1x128xf32>
    %33 = vector.shape_cast %32 : vector<1x128xf32> to vector<128xf32>
    %34 = vector.shape_cast %33 : vector<128xf32> to vector<1x128xf32>
    %35 = vector.shape_cast %31 : vector<16x1xi1> to vector<16x1xi1>
    %36 = vector.broadcast %35 : vector<16x1xi1> to vector<16x128xi1>
    %37 = vector.shape_cast %34 : vector<1x128xf32> to vector<1x128xf32>
    %38 = vector.broadcast %37 : vector<1x128xf32> to vector<16x128xf32>
    %39 = arith.select %36, %38, %29 : vector<16x128xi1>, vector<16x128xf32>
    %c3_i32 = arith.constant 3 : i32
    %40 = vector.broadcast %c3_i32 : i32 to vector<16x1xi32>
    %41 = arith.cmpi eq, %9, %40 : vector<16x1xi32>
    %c3 = arith.constant 3 : index
    %c0_7 = arith.constant 0 : index
    %42 = vector.load %arg3[%c3, %c0_7] : memref<6x128xf32, #tpu.memory_space<vmem>>, vector<1x128xf32>
    %43 = vector.shape_cast %42 : vector<1x128xf32> to vector<128xf32>
    %44 = vector.shape_cast %43 : vector<128xf32> to vector<1x128xf32>
    %45 = vector.shape_cast %41 : vector<16x1xi1> to vector<16x1xi1>
    %46 = vector.broadcast %45 : vector<16x1xi1> to vector<16x128xi1>
    %47 = vector.shape_cast %44 : vector<1x128xf32> to vector<1x128xf32>
    %48 = vector.broadcast %47 : vector<1x128xf32> to vector<16x128xf32>
    %49 = arith.select %46, %48, %39 : vector<16x128xi1>, vector<16x128xf32>
    %c4_i32 = arith.constant 4 : i32
    %50 = vector.broadcast %c4_i32 : i32 to vector<16x1xi32>
    %51 = arith.cmpi eq, %9, %50 : vector<16x1xi32>
    %c4 = arith.constant 4 : index
    %c0_8 = arith.constant 0 : index
    %52 = vector.load %arg3[%c4, %c0_8] : memref<6x128xf32, #tpu.memory_space<vmem>>, vector<1x128xf32>
    %53 = vector.shape_cast %52 : vector<1x128xf32> to vector<128xf32>
    %54 = vector.shape_cast %53 : vector<128xf32> to vector<1x128xf32>
    %55 = vector.shape_cast %51 : vector<16x1xi1> to vector<16x1xi1>
    %56 = vector.broadcast %55 : vector<16x1xi1> to vector<16x128xi1>
    %57 = vector.shape_cast %54 : vector<1x128xf32> to vector<1x128xf32>
    %58 = vector.broadcast %57 : vector<1x128xf32> to vector<16x128xf32>
    %59 = arith.select %56, %58, %49 : vector<16x128xi1>, vector<16x128xf32>
    %c5_i32 = arith.constant 5 : i32
    %60 = vector.broadcast %c5_i32 : i32 to vector<16x1xi32>
    %61 = arith.cmpi eq, %9, %60 : vector<16x1xi32>
    %c5 = arith.constant 5 : index
    %c0_9 = arith.constant 0 : index
    %62 = vector.load %arg3[%c5, %c0_9] : memref<6x128xf32, #tpu.memory_space<vmem>>, vector<1x128xf32>
    %63 = vector.shape_cast %62 : vector<1x128xf32> to vector<128xf32>
    %64 = vector.shape_cast %63 : vector<128xf32> to vector<1x128xf32>
    %65 = vector.shape_cast %61 : vector<16x1xi1> to vector<16x1xi1>
    %66 = vector.broadcast %65 : vector<16x1xi1> to vector<16x128xi1>
    %67 = vector.shape_cast %64 : vector<1x128xf32> to vector<1x128xf32>
    %68 = vector.broadcast %67 : vector<1x128xf32> to vector<16x128xf32>
    %69 = arith.select %66, %68, %59 : vector<16x128xi1>, vector<16x128xf32>
    %c0_10 = arith.constant 0 : index
    %c0_11 = arith.constant 0 : index
    %70 = vector.load %arg4[%c0_10, %c0_11] : memref<16x128xf32, #tpu.memory_space<vmem>>, vector<16x128xf32>
    tpu.vector_store %arg4[%c0_10, %c0_11], %69 {strides = array<i32>} : memref<16x128xf32, #tpu.memory_space<vmem>>, vector<16x128xf32>,
    return
  }
  func.func @transform_0(%arg0: i32) -> (i32, i32) {
    %c0_i32 = arith.constant 0 : i32
    %c0_i32_0 = arith.constant 0 : i32
    return %arg0, %c0_i32 : i32, i32
  }
  func.func @transform_1(%arg0: i32) -> (i32, i32) {
    %c0_i32 = arith.constant 0 : i32
    %c0_i32_0 = arith.constant 0 : i32
    %c0_i32_1 = arith.constant 0 : i32
    return %c0_i32, %c0_i32_0 : i32, i32
  }
  func.func @transform_2(%arg0: i32) -> (i32, i32) {
    %c0_i32 = arith.constant 0 : i32
    %c0_i32_0 = arith.constant 0 : i32
    %c0_i32_1 = arith.constant 0 : i32
    return %c0_i32, %c0_i32_0 : i32, i32
  }
  func.func @transform_3(%arg0: i32) -> (i32, i32) {
    %c0_i32 = arith.constant 0 : i32
    %c0_i32_0 = arith.constant 0 : i32
    return %arg0, %c0_i32 : i32, i32
  }
}

</mosaic_0001>

<llo_original>
// kernel: tpu_custom_call.1
$region0: #{tpu_custom_call.1}
  #allocation0 [shape = 'u32[]', space=smem, size = 0x4, offset = 0x4, fixed_abs, tag = 'smem constant byte address 0x4 - core index']
  #allocation1 [shape = 'u32[144,128]{1,0:T(1,128)}', space=vmem, size = 0x12000, scoped, tag = 'internal scratch']
  %s0 = inlined_call_operand.hbm [shape: f32[8,128], index: 0, kind: input, shape index: {}]
  %s1 = inlined_call_operand.hbm [shape: f32[8,128], index: 1, kind: output, shape index: {}]
  %s2 = sld [smem:[#allocation0]]
  $region18: #{tpu_custom_call.1} parent=0
    _
  %s4 = ssub.s32 1, %s2
  %s5 = scalar_select 0, %s4, %s2
  $region1: #{tpu_custom_call.1} parent=0
    #allocation2 [shape = 'u8[4096]{0}', space=vmem, size = 0x1000, scoped, tag = 'input window, operand 0, single buffered']
    #allocation3 [shape = 's32[1]{0}', space=sflag, size = 0x4, scoped, tag = 'scoped memory for tpu_custom_call.1']
    #allocation4 [shape = 's32[1]{0}', space=sflag, size = 0x4, scoped, tag = 'scoped memory for tpu_custom_call.1']
    #allocation5 [shape = 'u8[4096]{0}', space=vmem, size = 0x1000, scoped, tag = 'output window, operand 0, single buffered']
    %6 = vsyncpa [#allocation3], 0
    %7 = vsyncpa [#allocation4], 0
    // Predicated region
    $region2: #{tpu_custom_call.1} parent=1 // pred_check
      _
    $region3: #{tpu_custom_call.1} parent=1 // pred_check_branch
      %9 = sbr.rel (0) target = $region5
    $region4: #{tpu_custom_call.1} parent=1 // pred_region
      %s11 = ssub.s32 128, 128
      %12 = vsyncadd [#allocation3], %s11
      %s14 = sshll.u32 [#allocation2], 4
      %s15 = int_to_ptr.vmem [resolvable:$true] %s14
      %17 = dma.hbm_to_vmem [thread:$0]  %s0, 128, %s15, [#allocation3]
    $region5: #{tpu_custom_call.1} parent=1 // pred_fallthru
      _
    // Predicated region
    $region6: #{tpu_custom_call.1} parent=1 // pred_check
      _
    $region7: #{tpu_custom_call.1} parent=1 // pred_check_branch
      %19 = sbr.rel (0) target = $region9
    $region8: #{tpu_custom_call.1} parent=1 // pred_region
      %20 = dma.done [#allocation3], 128
    $region9: #{tpu_custom_call.1} parent=1 // pred_fallthru
      _
    %v21 = vld [vmem:[#allocation2] sm:$0xff]
    %v22 = vadd.f32 %v21, 1.0
    %23 = vst [vmem:[#allocation5] sm:$0xff] %v22
    // Predicated region
    $region10: #{tpu_custom_call.1} parent=1 // pred_check
      _
    $region11: #{tpu_custom_call.1} parent=1 // pred_check_branch
      %25 = sbr.rel (0) target = $region13
    $region12: #{tpu_custom_call.1} parent=1 // pred_region
      %s27 = ssub.s32 128, 128
      %28 = vsyncadd [#allocation4], %s27
      %s30 = sshll.u32 [#allocation5], 4
      %s31 = int_to_ptr.vmem [resolvable:$true] %s30
      %33 = dma.vmem_to_hbm [thread:$0]  %s31, 128, %s1, [#allocation4]
    $region13: #{tpu_custom_call.1} parent=1 // pred_fallthru
      _
    // Predicated region
    $region14: #{tpu_custom_call.1} parent=1 // pred_check
      _
    $region15: #{tpu_custom_call.1} parent=1 // pred_check_branch
      %35 = sbr.rel (0) target = $region17
    $region16: #{tpu_custom_call.1} parent=1 // pred_region
      %36 = dma.done [#allocation4], 128
    $region17: #{tpu_custom_call.1} parent=1 // pred_fallthru
      _
    %37 = vsyncpa [#allocation3], 1
    %38 = vsyncpa [#allocation4], 1

// kernel: embedding_lookup.1
$region0: #{embedding_lookup.1}
  #allocation0 [shape = 'u32[]', space=smem, size = 0x4, offset = 0x4, fixed_abs, tag = 'smem constant byte address 0x4 - core index']
  #allocation1 [shape = 'u32[144,128]{1,0:T(1,128)}', space=vmem, size = 0x12000, scoped, tag = 'internal scratch']
  %s0 = inlined_call_operand.vmem [shape: s32[16,1], index: 0, kind: input, shape index: {}]
  %s1 = inlined_call_operand.hbm [shape: f32[64,128], index: 1, kind: input, shape index: {}]
  %s2 = inlined_call_operand.vmem [shape: f32[6,128], index: 2, kind: input, shape index: {}]
  %s3 = inlined_call_operand.hbm [shape: f32[16,128], index: 3, kind: output, shape index: {}]
  %s4 = sld [smem:[#allocation0]]
  $region26: #{embedding_lookup.1} parent=0
    _
  %s6 = ssub.s32 1, %s4
  %s7 = scalar_select 0, %s6, %s4
  $region1: #{embedding_lookup.1} parent=0
    #allocation2 [shape = 'u8[32768]{0}', space=vmem, size = 0x8000, scoped, tag = 'input window, operand 1, single buffered']
    #allocation3 [shape = 's32[1]{0}', space=sflag, size = 0x4, scoped, tag = 'scoped memory for embedding_lookup.1']
    #allocation4 [shape = 's32[1]{0}', space=sflag, size = 0x4, scoped, tag = 'scoped memory for embedding_lookup.1']
    #allocation5 [shape = 'u8[8192]{0}', space=vmem, size = 0x2000, scoped, tag = 'output window, operand 0, single buffered']
    %8 = vsyncpa [#allocation3], 0
    %9 = vsyncpa [#allocation4], 0
    // Predicated region
    $region2: #{embedding_lookup.1} parent=1 // pred_check
      _
    $region3: #{embedding_lookup.1} parent=1 // pred_check_branch
      %11 = sbr.rel (0) target = $region5
    $region4: #{embedding_lookup.1} parent=1 // pred_region
      _
    $region5: #{embedding_lookup.1} parent=1 // pred_fallthru
      _
    // Predicated region
    $region6: #{embedding_lookup.1} parent=1 // pred_check
      _
    $region7: #{embedding_lookup.1} parent=1 // pred_check_branch
      %13 = sbr.rel (0) target = $region9
    $region8: #{embedding_lookup.1} parent=1 // pred_region
      %s15 = ssub.s32 1024, 1024
      %16 = vsyncadd [#allocation3], %s15
      %s17 = sshll.u32 [#allocation2], 4
      %s18 = int_to_ptr.vmem [resolvable:$true] %s17
      %23 = dma.hbm_to_vmem [thread:$0]  %s1, 1024, %s18, [#allocation3], 128, 128, 8
    $region9: #{embedding_lookup.1} parent=1 // pred_fallthru
      _
    // Predicated region
    $region10: #{embedding_lookup.1} parent=1 // pred_check
      _
    $region11: #{embedding_lookup.1} parent=1 // pred_check_branch
      %25 = sbr.rel (0) target = $region13
    $region12: #{embedding_lookup.1} parent=1 // pred_region
      _
    $region13: #{embedding_lookup.1} parent=1 // pred_fallthru
      _
    // Predicated region
    $region14: #{embedding_lookup.1} parent=1 // pred_check
      _
    $region15: #{embedding_lookup.1} parent=1 // pred_check_branch
      %27 = sbr.rel (0) target = $region17
    $region16: #{embedding_lookup.1} parent=1 // pred_region
      %28 = dma.done [#allocation3], 1024
    $region17: #{embedding_lookup.1} parent=1 // pred_fallthru
      _
    %v29 = vld [vmem:[%s0] sm:$0xff]
    %v30 = vld [vmem:[%s0 + $0x8] sm:$0xff]
    %v31 = vlaneseq
    %v32 = vand.u32 %v31, 127
    %33 = vset.pattern.permute.xlu0 0
    %34 = vperm.xlu0 %33, %v29
    %v35 = vpop.permute.xlu0 %34
    %36 = vset.pattern.permute.xlu0 0
    %37 = vperm.xlu0 %36, %v30
    %v38 = vpop.permute.xlu0 %37
    %vm39 = vcmp.eq.s32.totalorder %v32, %v35
    %vm40 = vcmp.eq.s32.totalorder %v32, %v38
    %v41 = vsel %vm39, 1, 0
    %v42 = vsel %vm40, 1, 0
    %v43 = vcvt.s32.f32 %v41
    %v44 = vcvt.s32.f32 %v42
    %v45 = vld [vmem:[#allocation2] sm:$0xff]
    %v46 = vld [vmem:[#allocation2 + $0x8] sm:$0xff]
    %v47 = vld [vmem:[#allocation2 + $0x10] sm:$0xff]
    %v48 = vld [vmem:[#allocation2 + $0x18] sm:$0xff]
    %v49 = vld [vmem:[#allocation2 + $0x20] sm:$0xff]
    %v50 = vld [vmem:[#allocation2 + $0x28] sm:$0xff]
    %v51 = vld [vmem:[#allocation2 + $0x30] sm:$0xff]
    %v52 = vld [vmem:[#allocation2 + $0x38] sm:$0xff]
    %vm53 = vcmask 523264
    %v55 = vsel %vm53, %v43, 0
    %v58 = vsel %vm53, %v44, 0
    %60 = vmatprep.subr.mxu0 0.0
    %v61 = vand.u32 %v45, 4294901760
    %62 = vmatpush1.msra.mxu0 %v61
    %63 = vmatprep.subr.mxu0 0.0
    %v64 = vand.u32 %v46, 4294901760
    %65 = vmatpush1.msra.mxu0 %v64
    %66 = vmatprep.subr.mxu0 0.0
    %v67 = vand.u32 %v47, 4294901760
    %68 = vmatpush1.msra.mxu0 %v67
    %69 = vmatprep.subr.mxu0 0.0
    %v70 = vand.u32 %v48, 4294901760
    %71 = vmatpush1.msra.mxu0 %v70
    %72 = vmatprep.subr.mxu0 0.0
    %v73 = vand.u32 %v49, 4294901760
    %74 = vmatpush1.msra.mxu0 %v73
    %75 = vmatprep.subr.mxu0 0.0
    %v76 = vand.u32 %v50, 4294901760
    %77 = vmatpush1.msra.mxu0 %v76
    %78 = vmatprep.subr.mxu0 0.0
    %v79 = vand.u32 %v51, 4294901760
    %80 = vmatpush1.msra.mxu0 %v79
    %81 = vmatprep.subr.mxu0 0.0
    %v82 = vand.u32 %v52, 4294901760
    %83 = vmatpush1.msra.mxu0 %v82
    %84 = vmatprep.subr.mxu0 0.0
    %85 = vmatpush1.msra.mxu0 0.0
    %86 = vmatprep.subr.mxu0 0.0
    %87 = vmatpush1.msra.mxu0 0.0
    %88 = vmatprep.subr.mxu0 0.0
    %89 = vmatpush1.msra.mxu0 0.0
    %90 = vmatprep.subr.mxu0 0.0
    %91 = vmatpush1.msra.mxu0 0.0
    %92 = vmatprep.subr.mxu0 0.0
    %93 = vmatpush1.msra.mxu0 0.0
    %94 = vmatprep.subr.mxu0 0.0
    %95 = vmatpush1.msra.mxu0 0.0
    %96 = vmatprep.subr.mxu0 0.0
    %97 = vmatpush1.msra.mxu0 0.0
    %98 = vmatprep.subr.mxu0 0.0
    %99 = vmatpush1.msra.mxu0 0.0
    %100 = vmatprep.subr.mxu0 0.0
    %101 = vmatpush1.msra.mxu0 0.0
    %102 = vmatprep.subr.mxu0 0.0
    %103 = vmatpush1.msra.mxu0 0.0
    %104 = vmatprep.subr.mxu0 0.0
    %105 = vmatpush1.msra.mxu0 0.0
    %106 = vmatprep.subr.mxu0 0.0
    %107 = vmatpush1.msra.mxu0 0.0
    %108 = vmatprep.subr.mxu0 0.0
    %109 = vmatpush1.msra.mxu0 0.0
    %110 = vmatprep.subr.mxu0 0.0
    %111 = vmatpush1.msra.mxu0 0.0
    %112 = vmatprep.subr.mxu0 0.0
    %113 = vmatpush1.msra.mxu0 0.0
    %114 = vmatprep.subr.mxu0 0.0
    %115 = vmatpush1.msra.mxu0 0.0
    %116 = vmatprep.subr.mxu0 0.0
    %117 = vmatpush1.msra.mxu0 0.0
    %118 = vmatprep.subr.mxu0 0.0
    %119 = vmatpush1.msra.mxu0 0.0
    %120 = vmatprep.subr.mxu0 0.0
    %121 = vmatpush1.msra.mxu0 0.0
    %122 = vmatprep.subr.mxu0 0.0
    %123 = vmatpush1.msra.mxu0 0.0
    %124 = vmatprep.subr.mxu0 0.0
    %125 = vmatpush1.msra.mxu0 0.0
    %126 = vmatprep.subr.mxu0 0.0
    %127 = vmatpush1.msra.mxu0 0.0
    %128 = vmatprep.subr.mxu0 0.0
    %129 = vmatpush1.msra.mxu0 0.0
    %130 = vmatprep.subr.mxu0 0.0
    %131 = vmatpush1.msra.mxu0 0.0
    %132 = vmatprep.mubr.f32.mxu0 0.0
    %v133 = vand.u32 %v55, 4294901760
    %v134 = vsub.f32 %v55, %v133
    %v135 = vand.u32 %v134, 4294901760
    %v136 = vsub.f32 %v134, %v135
    %v137 = vand.u32 %v136, 4294901760
    %138 = vmatmul.mubr.f32.gmra.mrb[0].mxu0 %v137
    %v139 = vpop.f32.mrb[0].mxu0
    %v140 = vadd.f32 0.0, %v139
    %v141 = vpop.f32.mrb[0].mxu0
    %142 = vmatprep.mubr.f32.mxu0 0.0
    %v143 = vand.u32 %v58, 4294901760
    %v144 = vsub.f32 %v58, %v143
    %v145 = vand.u32 %v144, 4294901760
    %v146 = vsub.f32 %v144, %v145
    %v147 = vand.u32 %v146, 4294901760
    %148 = vmatmul.mubr.f32.gmra.mrb[0].mxu0 %v147
    %v149 = vpop.f32.mrb[0].mxu0
    %v150 = vadd.f32 0.0, %v149
    %v151 = vpop.f32.mrb[0].mxu0
    %152 = vdwg.mxu0
    %153 = vmatprep.subr.mxu0 0.0
    %v154 = vand.u32 %v45, 4294901760
    %v155 = vsub.f32 %v45, %v154
    %v156 = vand.u32 %v155, 4294901760
    %v157 = vsub.f32 %v155, %v156
    %v158 = vand.u32 %v157, 4294901760
    %159 = vmatpush1.msra.mxu0 %v158
    %160 = vmatprep.subr.mxu0 0.0
    %v161 = vand.u32 %v46, 4294901760
    %v162 = vsub.f32 %v46, %v161
    %v163 = vand.u32 %v162, 4294901760
    %v164 = vsub.f32 %v162, %v163
    %v165 = vand.u32 %v164, 4294901760
    %166 = vmatpush1.msra.mxu0 %v165
    %167 = vmatprep.subr.mxu0 0.0
    %v168 = vand.u32 %v47, 4294901760
    %v169 = vsub.f32 %v47, %v168
    %v170 = vand.u32 %v169, 4294901760
    %v171 = vsub.f32 %v169, %v170
    %v172 = vand.u32 %v171, 4294901760
    %173 = vmatpush1.msra.mxu0 %v172
    %174 = vmatprep.subr.mxu0 0.0
    %v175 = vand.u32 %v48, 4294901760
    %v176 = vsub.f32 %v48, %v175
    %v177 = vand.u32 %v176, 4294901760
    %v178 = vsub.f32 %v176, %v177
    %v179 = vand.u32 %v178, 4294901760
    %180 = vmatpush1.msra.mxu0 %v179
    %181 = vmatprep.subr.mxu0 0.0
    %v182 = vand.u32 %v49, 4294901760
    %v183 = vsub.f32 %v49, %v182
    %v184 = vand.u32 %v183, 4294901760
    %v185 = vsub.f32 %v183, %v184
    %v186 = vand.u32 %v185, 4294901760
    %187 = vmatpush1.msra.mxu0 %v186
    %188 = vmatprep.subr.mxu0 0.0
    %v189 = vand.u32 %v50, 4294901760
    %v190 = vsub.f32 %v50, %v189
    %v191 = vand.u32 %v190, 4294901760
    %v192 = vsub.f32 %v190, %v191
    %v193 = vand.u32 %v192, 4294901760
    %194 = vmatpush1.msra.mxu0 %v193
    %195 = vmatprep.subr.mxu0 0.0
    %v196 = vand.u32 %v51, 4294901760
    %v197 = vsub.f32 %v51, %v196
    %v198 = vand.u32 %v197, 4294901760
    %v199 = vsub.f32 %v197, %v198
    %v200 = vand.u32 %v199, 4294901760
    %201 = vmatpush1.msra.mxu0 %v200
    %202 = vmatprep.subr.mxu0 0.0
    %v203 = vand.u32 %v52, 4294901760
    %v204 = vsub.f32 %v52, %v203
    %v205 = vand.u32 %v204, 4294901760
    %v206 = vsub.f32 %v204, %v205
    %v207 = vand.u32 %v206, 4294901760
    %208 = vmatpush1.msra.mxu0 %v207
    %209 = vmatprep.subr.mxu0 0.0
    %210 = vmatpush1.msra.mxu0 0.0
    %211 = vmatprep.subr.mxu0 0.0
    %212 = vmatpush1.msra.mxu0 0.0
    %213 = vmatprep.subr.mxu0 0.0
    %214 = vmatpush1.msra.mxu0 0.0
    %215 = vmatprep.subr.mxu0 0.0
    %216 = vmatpush1.msra.mxu0 0.0
    %217 = vmatprep.subr.mxu0 0.0
    %218 = vmatpush1.msra.mxu0 0.0
    %219 = vmatprep.subr.mxu0 0.0
    %220 = vmatpush1.msra.mxu0 0.0
    %221 = vmatprep.subr.mxu0 0.0
    %222 = vmatpush1.msra.mxu0 0.0
    %223 = vmatprep.subr.mxu0 0.0
    %224 = vmatpush1.msra.mxu0 0.0
    %225 = vmatprep.subr.mxu0 0.0
    %226 = vmatpush1.msra.mxu0 0.0
    %227 = vmatprep.subr.mxu0 0.0
    %228 = vmatpush1.msra.mxu0 0.0
    %229 = vmatprep.subr.mxu0 0.0
    %230 = vmatpush1.msra.mxu0 0.0
    %231 = vmatprep.subr.mxu0 0.0
    %232 = vmatpush1.msra.mxu0 0.0
    %233 = vmatprep.subr.mxu0 0.0
    %234 = vmatpush1.msra.mxu0 0.0
    %235 = vmatprep.subr.mxu0 0.0
    %236 = vmatpush1.msra.mxu0 0.0
    %237 = vmatprep.subr.mxu0 0.0
    %238 = vmatpush1.msra.mxu0 0.0
    %239 = vmatprep.subr.mxu0 0.0
    %240 = vmatpush1.msra.mxu0 0.0
    %241 = vmatprep.subr.mxu0 0.0
    %242 = vmatpush1.msra.mxu0 0.0
    %243 = vmatprep.subr.mxu0 0.0
    %244 = vmatpush1.msra.mxu0 0.0
    %245 = vmatprep.subr.mxu0 0.0
    %246 = vmatpush1.msra.mxu0 0.0
    %247 = vmatprep.subr.mxu0 0.0
    %248 = vmatpush1.msra.mxu0 0.0
    %249 = vmatprep.subr.mxu0 0.0
    %250 = vmatpush1.msra.mxu0 0.0
    %251 = vmatprep.subr.mxu0 0.0
    %252 = vmatpush1.msra.mxu0 0.0
    %253 = vmatprep.subr.mxu0 0.0
    %254 = vmatpush1.msra.mxu0 0.0
    %255 = vmatprep.subr.mxu0 0.0
    %256 = vmatpush1.msra.mxu0 0.0
    %257 = vmatprep.mubr.f32.mxu0 0.0
    %v258 = vand.u32 %v55, 4294901760
    %259 = vmatmul.mubr.f32.gmra.mrb[0].mxu0 %v258
    %v260 = vpop.f32.mrb[0].mxu0
    %v261 = vadd.f32 %v140, %v260
    %v262 = vpop.f32.mrb[0].mxu0
    %263 = vmatprep.mubr.f32.mxu0 0.0
    %v264 = vand.u32 %v58, 4294901760
    %265 = vmatmul.mubr.f32.gmra.mrb[0].mxu0 %v264
    %v266 = vpop.f32.mrb[0].mxu0
    %v267 = vadd.f32 %v150, %v266
    %v268 = vpop.f32.mrb[0].mxu0
    %269 = vdwg.mxu0
    %270 = vmatprep.subr.mxu0 0.0
    %v271 = vand.u32 %v45, 4294901760
    %v272 = vsub.f32 %v45, %v271
    %273 = vmatpush1.msra.mxu0 %v272
    %274 = vmatprep.subr.mxu0 0.0
    %v275 = vand.u32 %v46, 4294901760
    %v276 = vsub.f32 %v46, %v275
    %277 = vmatpush1.msra.mxu0 %v276
    %278 = vmatprep.subr.mxu0 0.0
    %v279 = vand.u32 %v47, 4294901760
    %v280 = vsub.f32 %v47, %v279
    %281 = vmatpush1.msra.mxu0 %v280
    %282 = vmatprep.subr.mxu0 0.0
    %v283 = vand.u32 %v48, 4294901760
    %v284 = vsub.f32 %v48, %v283
    %285 = vmatpush1.msra.mxu0 %v284
    %286 = vmatprep.subr.mxu0 0.0
    %v287 = vand.u32 %v49, 4294901760
    %v288 = vsub.f32 %v49, %v287
    %289 = vmatpush1.msra.mxu0 %v288
    %290 = vmatprep.subr.mxu0 0.0
    %v291 = vand.u32 %v50, 4294901760
    %v292 = vsub.f32 %v50, %v291
    %293 = vmatpush1.msra.mxu0 %v292
    %294 = vmatprep.subr.mxu0 0.0
    %v295 = vand.u32 %v51, 4294901760
    %v296 = vsub.f32 %v51, %v295
    %297 = vmatpush1.msra.mxu0 %v296
    %298 = vmatprep.subr.mxu0 0.0
    %v299 = vand.u32 %v52, 4294901760
    %v300 = vsub.f32 %v52, %v299
    %301 = vmatpush1.msra.mxu0 %v300
    %302 = vmatprep.subr.mxu0 0.0
    %303 = vmatpush1.msra.mxu0 0.0
    %304 = vmatprep.subr.mxu0 0.0
    %305 = vmatpush1.msra.mxu0 0.0
    %306 = vmatprep.subr.mxu0 0.0
    %307 = vmatpush1.msra.mxu0 0.0
    %308 = vmatprep.subr.mxu0 0.0
    %309 = vmatpush1.msra.mxu0 0.0
    %310 = vmatprep.subr.mxu0 0.0
    %311 = vmatpush1.msra.mxu0 0.0
    %312 = vmatprep.subr.mxu0 0.0
    %313 = vmatpush1.msra.mxu0 0.0
    %314 = vmatprep.subr.mxu0 0.0
    %315 = vmatpush1.msra.mxu0 0.0
    %316 = vmatprep.subr.mxu0 0.0
    %317 = vmatpush1.msra.mxu0 0.0
    %318 = vmatprep.subr.mxu0 0.0
    %319 = vmatpush1.msra.mxu0 0.0
    %320 = vmatprep.subr.mxu0 0.0
    %321 = vmatpush1.msra.mxu0 0.0
    %322 = vmatprep.subr.mxu0 0.0
    %323 = vmatpush1.msra.mxu0 0.0
    %324 = vmatprep.subr.mxu0 0.0
    %325 = vmatpush1.msra.mxu0 0.0
    %326 = vmatprep.subr.mxu0 0.0
    %327 = vmatpush1.msra.mxu0 0.0
    %328 = vmatprep.subr.mxu0 0.0
    %329 = vmatpush1.msra.mxu0 0.0
    %330 = vmatprep.subr.mxu0 0.0
    %331 = vmatpush1.msra.mxu0 0.0
    %332 = vmatprep.subr.mxu0 0.0
    %333 = vmatpush1.msra.mxu0 0.0
    %334 = vmatprep.subr.mxu0 0.0
    %335 = vmatpush1.msra.mxu0 0.0
    %336 = vmatprep.subr.mxu0 0.0
    %337 = vmatpush1.msra.mxu0 0.0
    %338 = vmatprep.subr.mxu0 0.0
    %339 = vmatpush1.msra.mxu0 0.0
    %340 = vmatprep.subr.mxu0 0.0
    %341 = vmatpush1.msra.mxu0 0.0
    %342 = vmatprep.subr.mxu0 0.0
    %343 = vmatpush1.msra.mxu0 0.0
    %344 = vmatprep.subr.mxu0 0.0
    %345 = vmatpush1.msra.mxu0 0.0
    %346 = vmatprep.subr.mxu0 0.0
    %347 = vmatpush1.msra.mxu0 0.0
    %348 = vmatprep.subr.mxu0 0.0
    %349 = vmatpush1.msra.mxu0 0.0
    %350 = vmatprep.mubr.f32.mxu0 0.0
    %v351 = vand.u32 %v55, 4294901760
    %v352 = vsub.f32 %v55, %v351
    %353 = vmatmul.mubr.f32.gmra.mrb[0].mxu0 %v352
    %v354 = vpop.f32.mrb[0].mxu0
    %v355 = vadd.f32 %v261, %v354
    %v356 = vpop.f32.mrb[0].mxu0
    %357 = vmatprep.mubr.f32.mxu0 0.0
    %v358 = vand.u32 %v58, 4294901760
    %v359 = vsub.f32 %v58, %v358
    %360 = vmatmul.mubr.f32.gmra.mrb[0].mxu0 %v359
    %v361 = vpop.f32.mrb[0].mxu0
    %v362 = vadd.f32 %v267, %v361
    %v363 = vpop.f32.mrb[0].mxu0
    %364 = vdwg.mxu0
    %365 = vmatprep.subr.mxu0 0.0
    %v366 = vand.u32 %v45, 4294901760
    %367 = vmatpush1.msra.mxu0 %v366
    %368 = vmatprep.subr.mxu0 0.0
    %v369 = vand.u32 %v46, 4294901760
    %370 = vmatpush1.msra.mxu0 %v369
    %371 = vmatprep.subr.mxu0 0.0
    %v372 = vand.u32 %v47, 4294901760
    %373 = vmatpush1.msra.mxu0 %v372
    %374 = vmatprep.subr.mxu0 0.0
    %v375 = vand.u32 %v48, 4294901760
    %376 = vmatpush1.msra.mxu0 %v375
    %377 = vmatprep.subr.mxu0 0.0
    %v378 = vand.u32 %v49, 4294901760
    %379 = vmatpush1.msra.mxu0 %v378
    %380 = vmatprep.subr.mxu0 0.0
    %v381 = vand.u32 %v50, 4294901760
    %382 = vmatpush1.msra.mxu0 %v381
    %383 = vmatprep.subr.mxu0 0.0
    %v384 = vand.u32 %v51, 4294901760
    %385 = vmatpush1.msra.mxu0 %v384
    %386 = vmatprep.subr.mxu0 0.0
    %v387 = vand.u32 %v52, 4294901760
    %388 = vmatpush1.msra.mxu0 %v387
    %389 = vmatprep.subr.mxu0 0.0
    %390 = vmatpush1.msra.mxu0 0.0
    %391 = vmatprep.subr.mxu0 0.0
    %392 = vmatpush1.msra.mxu0 0.0
    %393 = vmatprep.subr.mxu0 0.0
    %394 = vmatpush1.msra.mxu0 0.0
    %395 = vmatprep.subr.mxu0 0.0
    %396 = vmatpush1.msra.mxu0 0.0
    %397 = vmatprep.subr.mxu0 0.0
    %398 = vmatpush1.msra.mxu0 0.0
    %399 = vmatprep.subr.mxu0 0.0
    %400 = vmatpush1.msra.mxu0 0.0
    %401 = vmatprep.subr.mxu0 0.0
    %402 = vmatpush1.msra.mxu0 0.0
    %403 = vmatprep.subr.mxu0 0.0
    %404 = vmatpush1.msra.mxu0 0.0
    %405 = vmatprep.subr.mxu0 0.0
    %406 = vmatpush1.msra.mxu0 0.0
    %407 = vmatprep.subr.mxu0 0.0
    %408 = vmatpush1.msra.mxu0 0.0
    %409 = vmatprep.subr.mxu0 0.0
    %410 = vmatpush1.msra.mxu0 0.0
    %411 = vmatprep.subr.mxu0 0.0
    %412 = vmatpush1.msra.mxu0 0.0
    %413 = vmatprep.subr.mxu0 0.0
    %414 = vmatpush1.msra.mxu0 0.0
    %415 = vmatprep.subr.mxu0 0.0
    %416 = vmatpush1.msra.mxu0 0.0
    %417 = vmatprep.subr.mxu0 0.0
    %418 = vmatpush1.msra.mxu0 0.0
    %419 = vmatprep.subr.mxu0 0.0
    %420 = vmatpush1.msra.mxu0 0.0
    %421 = vmatprep.subr.mxu0 0.0
    %422 = vmatpush1.msra.mxu0 0.0
    %423 = vmatprep.subr.mxu0 0.0
    %424 = vmatpush1.msra.mxu0 0.0
    %425 = vmatprep.subr.mxu0 0.0
    %426 = vmatpush1.msra.mxu0 0.0
    %427 = vmatprep.subr.mxu0 0.0
    %428 = vmatpush1.msra.mxu0 0.0
    %429 = vmatprep.subr.mxu0 0.0
    %430 = vmatpush1.msra.mxu0 0.0
    %431 = vmatprep.subr.mxu0 0.0
    %432 = vmatpush1.msra.mxu0 0.0
    %433 = vmatprep.subr.mxu0 0.0
    %434 = vmatpush1.msra.mxu0 0.0
    %435 = vmatprep.subr.mxu0 0.0
    %436 = vmatpush1.msra.mxu0 0.0
    %437 = vmatprep.mubr.f32.mxu0 0.0
    %v438 = vand.u32 %v55, 4294901760
    %v439 = vsub.f32 %v55, %v438
    %v440 = vand.u32 %v439, 4294901760
    %441 = vmatmul.mubr.f32.gmra.mrb[0].mxu0 %v440
    %v442 = vpop.f32.mrb[0].mxu0
    %v443 = vadd.f32 %v355, %v442
    %v444 = vpop.f32.mrb[0].mxu0
    %445 = vmatprep.mubr.f32.mxu0 0.0
    %v446 = vand.u32 %v58, 4294901760
    %v447 = vsub.f32 %v58, %v446
    %v448 = vand.u32 %v447, 4294901760
    %449 = vmatmul.mubr.f32.gmra.mrb[0].mxu0 %v448
    %v450 = vpop.f32.mrb[0].mxu0
    %v451 = vadd.f32 %v362, %v450
    %v452 = vpop.f32.mrb[0].mxu0
    %453 = vdwg.mxu0
    %454 = vmatprep.subr.mxu0 0.0
    %v455 = vand.u32 %v45, 4294901760
    %v456 = vsub.f32 %v45, %v455
    %v457 = vand.u32 %v456, 4294901760
    %458 = vmatpush1.msra.mxu0 %v457
    %459 = vmatprep.subr.mxu0 0.0
    %v460 = vand.u32 %v46, 4294901760
    %v461 = vsub.f32 %v46, %v460
    %v462 = vand.u32 %v461, 4294901760
    %463 = vmatpush1.msra.mxu0 %v462
    %464 = vmatprep.subr.mxu0 0.0
    %v465 = vand.u32 %v47, 4294901760
    %v466 = vsub.f32 %v47, %v465
    %v467 = vand.u32 %v466, 4294901760
    %468 = vmatpush1.msra.mxu0 %v467
    %469 = vmatprep.subr.mxu0 0.0
    %v470 = vand.u32 %v48, 4294901760
    %v471 = vsub.f32 %v48, %v470
    %v472 = vand.u32 %v471, 4294901760
    %473 = vmatpush1.msra.mxu0 %v472
    %474 = vmatprep.subr.mxu0 0.0
    %v475 = vand.u32 %v49, 4294901760
    %v476 = vsub.f32 %v49, %v475
    %v477 = vand.u32 %v476, 4294901760
    %478 = vmatpush1.msra.mxu0 %v477
    %479 = vmatprep.subr.mxu0 0.0
    %v480 = vand.u32 %v50, 4294901760
    %v481 = vsub.f32 %v50, %v480
    %v482 = vand.u32 %v481, 4294901760
    %483 = vmatpush1.msra.mxu0 %v482
    %484 = vmatprep.subr.mxu0 0.0
    %v485 = vand.u32 %v51, 4294901760
    %v486 = vsub.f32 %v51, %v485
    %v487 = vand.u32 %v486, 4294901760
    %488 = vmatpush1.msra.mxu0 %v487
    %489 = vmatprep.subr.mxu0 0.0
    %v490 = vand.u32 %v52, 4294901760
    %v491 = vsub.f32 %v52, %v490
    %v492 = vand.u32 %v491, 4294901760
    %493 = vmatpush1.msra.mxu0 %v492
    %494 = vmatprep.subr.mxu0 0.0
    %495 = vmatpush1.msra.mxu0 0.0
    %496 = vmatprep.subr.mxu0 0.0
    %497 = vmatpush1.msra.mxu0 0.0
    %498 = vmatprep.subr.mxu0 0.0
    %499 = vmatpush1.msra.mxu0 0.0
    %500 = vmatprep.subr.mxu0 0.0
    %501 = vmatpush1.msra.mxu0 0.0
    %502 = vmatprep.subr.mxu0 0.0
    %503 = vmatpush1.msra.mxu0 0.0
    %504 = vmatprep.subr.mxu0 0.0
    %505 = vmatpush1.msra.mxu0 0.0
    %506 = vmatprep.subr.mxu0 0.0
    %507 = vmatpush1.msra.mxu0 0.0
    %508 = vmatprep.subr.mxu0 0.0
    %509 = vmatpush1.msra.mxu0 0.0
    %510 = vmatprep.subr.mxu0 0.0
    %511 = vmatpush1.msra.mxu0 0.0
    %512 = vmatprep.subr.mxu0 0.0
    %513 = vmatpush1.msra.mxu0 0.0
    %514 = vmatprep.subr.mxu0 0.0
    %515 = vmatpush1.msra.mxu0 0.0
    %516 = vmatprep.subr.mxu0 0.0
    %517 = vmatpush1.msra.mxu0 0.0
    %518 = vmatprep.subr.mxu0 0.0
    %519 = vmatpush1.msra.mxu0 0.0
    %520 = vmatprep.subr.mxu0 0.0
    %521 = vmatpush1.msra.mxu0 0.0
    %522 = vmatprep.subr.mxu0 0.0
    %523 = vmatpush1.msra.mxu0 0.0
    %524 = vmatprep.subr.mxu0 0.0
    %525 = vmatpush1.msra.mxu0 0.0
    %526 = vmatprep.subr.mxu0 0.0
    %527 = vmatpush1.msra.mxu0 0.0
    %528 = vmatprep.subr.mxu0 0.0
    %529 = vmatpush1.msra.mxu0 0.0
    %530 = vmatprep.subr.mxu0 0.0
    %531 = vmatpush1.msra.mxu0 0.0
    %532 = vmatprep.subr.mxu0 0.0
    %533 = vmatpush1.msra.mxu0 0.0
    %534 = vmatprep.subr.mxu0 0.0
    %535 = vmatpush1.msra.mxu0 0.0
    %536 = vmatprep.subr.mxu0 0.0
    %537 = vmatpush1.msra.mxu0 0.0
    %538 = vmatprep.subr.mxu0 0.0
    %539 = vmatpush1.msra.mxu0 0.0
    %540 = vmatprep.subr.mxu0 0.0
    %541 = vmatpush1.msra.mxu0 0.0
    %542 = vmatprep.mubr.f32.mxu0 0.0
    %v543 = vand.u32 %v55, 4294901760
    %544 = vmatmul.mubr.f32.gmra.mrb[0].mxu0 %v543
    %v545 = vpop.f32.mrb[0].mxu0
    %v546 = vadd.f32 %v443, %v545
    %v547 = vpop.f32.mrb[0].mxu0
    %548 = vmatprep.mubr.f32.mxu0 0.0
    %v549 = vand.u32 %v58, 4294901760
    %550 = vmatmul.mubr.f32.gmra.mrb[0].mxu0 %v549
    %v551 = vpop.f32.mrb[0].mxu0
    %v552 = vadd.f32 %v451, %v551
    %v553 = vpop.f32.mrb[0].mxu0
    %554 = vdwg.mxu0
    %555 = vmatprep.subr.mxu0 0.0
    %v556 = vand.u32 %v45, 4294901760
    %557 = vmatpush1.msra.mxu0 %v556
    %558 = vmatprep.subr.mxu0 0.0
    %v559 = vand.u32 %v46, 4294901760
    %560 = vmatpush1.msra.mxu0 %v559
    %561 = vmatprep.subr.mxu0 0.0
    %v562 = vand.u32 %v47, 4294901760
    %563 = vmatpush1.msra.mxu0 %v562
    %564 = vmatprep.subr.mxu0 0.0
    %v565 = vand.u32 %v48, 4294901760
    %566 = vmatpush1.msra.mxu0 %v565
    %567 = vmatprep.subr.mxu0 0.0
    %v568 = vand.u32 %v49, 4294901760
    %569 = vmatpush1.msra.mxu0 %v568
    %570 = vmatprep.subr.mxu0 0.0
    %v571 = vand.u32 %v50, 4294901760
    %572 = vmatpush1.msra.mxu0 %v571
    %573 = vmatprep.subr.mxu0 0.0
    %v574 = vand.u32 %v51, 4294901760
    %575 = vmatpush1.msra.mxu0 %v574
    %576 = vmatprep.subr.mxu0 0.0
    %v577 = vand.u32 %v52, 4294901760
    %578 = vmatpush1.msra.mxu0 %v577
    %579 = vmatprep.subr.mxu0 0.0
    %580 = vmatpush1.msra.mxu0 0.0
    %581 = vmatprep.subr.mxu0 0.0
    %582 = vmatpush1.msra.mxu0 0.0
    %583 = vmatprep.subr.mxu0 0.0
    %584 = vmatpush1.msra.mxu0 0.0
    %585 = vmatprep.subr.mxu0 0.0
    %586 = vmatpush1.msra.mxu0 0.0
    %587 = vmatprep.subr.mxu0 0.0
    %588 = vmatpush1.msra.mxu0 0.0
    %589 = vmatprep.subr.mxu0 0.0
    %590 = vmatpush1.msra.mxu0 0.0
    %591 = vmatprep.subr.mxu0 0.0
    %592 = vmatpush1.msra.mxu0 0.0
    %593 = vmatprep.subr.mxu0 0.0
    %594 = vmatpush1.msra.mxu0 0.0
    %595 = vmatprep.subr.mxu0 0.0
    %596 = vmatpush1.msra.mxu0 0.0
    %597 = vmatprep.subr.mxu0 0.0
    %598 = vmatpush1.msra.mxu0 0.0
    %599 = vmatprep.subr.mxu0 0.0
    %600 = vmatpush1.msra.mxu0 0.0
    %601 = vmatprep.subr.mxu0 0.0
    %602 = vmatpush1.msra.mxu0 0.0
    %603 = vmatprep.subr.mxu0 0.0
    %604 = vmatpush1.msra.mxu0 0.0
    %605 = vmatprep.subr.mxu0 0.0
    %606 = vmatpush1.msra.mxu0 0.0
    %607 = vmatprep.subr.mxu0 0.0
    %608 = vmatpush1.msra.mxu0 0.0
    %609 = vmatprep.subr.mxu0 0.0
    %610 = vmatpush1.msra.mxu0 0.0
    %611 = vmatprep.subr.mxu0 0.0
    %612 = vmatpush1.msra.mxu0 0.0
    %613 = vmatprep.subr.mxu0 0.0
    %614 = vmatpush1.msra.mxu0 0.0
    %615 = vmatprep.subr.mxu0 0.0
    %616 = vmatpush1.msra.mxu0 0.0
    %617 = vmatprep.subr.mxu0 0.0
    %618 = vmatpush1.msra.mxu0 0.0
    %619 = vmatprep.subr.mxu0 0.0
    %620 = vmatpush1.msra.mxu0 0.0
    %621 = vmatprep.subr.mxu0 0.0
    %622 = vmatpush1.msra.mxu0 0.0
    %623 = vmatprep.subr.mxu0 0.0
    %624 = vmatpush1.msra.mxu0 0.0
    %625 = vmatprep.subr.mxu0 0.0
    %626 = vmatpush1.msra.mxu0 0.0
    %627 = vmatprep.mubr.f32.mxu0 0.0
    %v628 = vand.u32 %v55, 4294901760
    %629 = vmatmul.mubr.f32.gmra.mrb[0].mxu0 %v628
    %v630 = vpop.f32.mrb[0].mxu0
    %v631 = vadd.f32 %v546, %v630
    %v632 = vpop.f32.mrb[0].mxu0
    %633 = vmatprep.mubr.f32.mxu0 0.0
    %v634 = vand.u32 %v58, 4294901760
    %635 = vmatmul.mubr.f32.gmra.mrb[0].mxu0 %v634
    %v636 = vpop.f32.mrb[0].mxu0
    %v637 = vadd.f32 %v552, %v636
    %v638 = vpop.f32.mrb[0].mxu0
    %639 = vdwg.mxu0
    %v640 = vsub.s32 %v29, 64
    %v641 = vsub.s32 %v30, 64
    %vm642 = vcmp.eq.s32.totalorder %v640, 0
    %vm643 = vcmp.eq.s32.totalorder %v641, 0
    %v644 = vld [vmem:[%s2] sm:$0x1]
    %v645 = vsel %vm642, 1, 0
    %v646 = vsel %vm643, 1, 0
    %647 = vset.pattern.permute.xlu0 0
    %648 = vperm.xlu0 %647, %v645
    %v649 = vpop.permute.xlu0 %648
    %650 = vset.pattern.permute.xlu0 0
    %651 = vperm.xlu0 %650, %v646
    %v652 = vpop.permute.xlu0 %651
    %vm653 = vcmp.eq.s32.totalorder %v649, 1
    %vm654 = vcmp.eq.s32.totalorder %v652, 1
    %v655 = vlaneseq
    %v656 = vshrl.u32 %v655, 7
    %v657 = vsub.s32 0, %v656
    %v658 = vrot.slane %v644, %v657
    %v659 = vsel %vm653, %v658, %v631
    %v660 = vsel %vm654, %v658, %v637
    %vm661 = vcmp.eq.s32.totalorder %v640, 1
    %vm662 = vcmp.eq.s32.totalorder %v641, 1
    %v663 = vld [vmem:[%s2 + $0x1] sm:$0x1]
    %v664 = vsel %vm661, 1, 0
    %v665 = vsel %vm662, 1, 0
    %666 = vset.pattern.permute.xlu0 0
    %667 = vperm.xlu0 %666, %v664
    %v668 = vpop.permute.xlu0 %667
    %669 = vset.pattern.permute.xlu0 0
    %670 = vperm.xlu0 %669, %v665
    %v671 = vpop.permute.xlu0 %670
    %vm672 = vcmp.eq.s32.totalorder %v668, 1
    %vm673 = vcmp.eq.s32.totalorder %v671, 1
    %v674 = vlaneseq
    %v675 = vshrl.u32 %v674, 7
    %v676 = vsub.s32 0, %v675
    %v677 = vrot.slane %v663, %v676
    %v678 = vsel %vm672, %v677, %v659
    %v679 = vsel %vm673, %v677, %v660
    %vm680 = vcmp.eq.s32.totalorder %v640, 2
    %vm681 = vcmp.eq.s32.totalorder %v641, 2
    %v682 = vld [vmem:[%s2 + $0x2] sm:$0x1]
    %v683 = vsel %vm680, 1, 0
    %v684 = vsel %vm681, 1, 0
    %685 = vset.pattern.permute.xlu0 0
    %686 = vperm.xlu0 %685, %v683
    %v687 = vpop.permute.xlu0 %686
    %688 = vset.pattern.permute.xlu0 0
    %689 = vperm.xlu0 %688, %v684
    %v690 = vpop.permute.xlu0 %689
    %vm691 = vcmp.eq.s32.totalorder %v687, 1
    %vm692 = vcmp.eq.s32.totalorder %v690, 1
    %v693 = vlaneseq
    %v694 = vshrl.u32 %v693, 7
    %v695 = vsub.s32 0, %v694
    %v696 = vrot.slane %v682, %v695
    %v697 = vsel %vm691, %v696, %v678
    %v698 = vsel %vm692, %v696, %v679
    %vm699 = vcmp.eq.s32.totalorder %v640, 3
    %vm700 = vcmp.eq.s32.totalorder %v641, 3
    %v701 = vld [vmem:[%s2 + $0x3] sm:$0x1]
    %v702 = vsel %vm699, 1, 0
    %v703 = vsel %vm700, 1, 0
    %704 = vset.pattern.permute.xlu0 0
    %705 = vperm.xlu0 %704, %v702
    %v706 = vpop.permute.xlu0 %705
    %707 = vset.pattern.permute.xlu0 0
    %708 = vperm.xlu0 %707, %v703
    %v709 = vpop.permute.xlu0 %708
    %vm710 = vcmp.eq.s32.totalorder %v706, 1
    %vm711 = vcmp.eq.s32.totalorder %v709, 1
    %v712 = vlaneseq
    %v713 = vshrl.u32 %v712, 7
    %v714 = vsub.s32 0, %v713
    %v715 = vrot.slane %v701, %v714
    %v716 = vsel %vm710, %v715, %v697
    %v717 = vsel %vm711, %v715, %v698
    %vm718 = vcmp.eq.s32.totalorder %v640, 4
    %vm719 = vcmp.eq.s32.totalorder %v641, 4
    %v720 = vld [vmem:[%s2 + $0x4] sm:$0x1]
    %v721 = vsel %vm718, 1, 0
    %v722 = vsel %vm719, 1, 0
    %723 = vset.pattern.permute.xlu0 0
    %724 = vperm.xlu0 %723, %v721
    %v725 = vpop.permute.xlu0 %724
    %726 = vset.pattern.permute.xlu0 0
    %727 = vperm.xlu0 %726, %v722
    %v728 = vpop.permute.xlu0 %727
    %vm729 = vcmp.eq.s32.totalorder %v725, 1
    %vm730 = vcmp.eq.s32.totalorder %v728, 1
    %v731 = vlaneseq
    %v732 = vshrl.u32 %v731, 7
    %v733 = vsub.s32 0, %v732
    %v734 = vrot.slane %v720, %v733
    %v735 = vsel %vm729, %v734, %v716
    %v736 = vsel %vm730, %v734, %v717
    %vm737 = vcmp.eq.s32.totalorder %v640, 5
    %vm738 = vcmp.eq.s32.totalorder %v641, 5
    %v739 = vld [vmem:[%s2 + $0x5] sm:$0x1]
    %v740 = vsel %vm737, 1, 0
    %v741 = vsel %vm738, 1, 0
    %742 = vset.pattern.permute.xlu0 0
    %743 = vperm.xlu0 %742, %v740
    %v744 = vpop.permute.xlu0 %743
    %745 = vset.pattern.permute.xlu0 0
    %746 = vperm.xlu0 %745, %v741
    %v747 = vpop.permute.xlu0 %746
    %vm748 = vcmp.eq.s32.totalorder %v744, 1
    %vm749 = vcmp.eq.s32.totalorder %v747, 1
    %v750 = vlaneseq
    %v751 = vshrl.u32 %v750, 7
    %v752 = vsub.s32 0, %v751
    %v753 = vrot.slane %v739, %v752
    %v754 = vsel %vm748, %v753, %v735
    %v755 = vsel %vm749, %v753, %v736
    %756 = vst [vmem:[#allocation5] sm:$0xff] %v754
    %757 = vst [vmem:[#allocation5 + $0x8] sm:$0xff] %v755
    // Predicated region
    $region18: #{embedding_lookup.1} parent=1 // pred_check
      _
    $region19: #{embedding_lookup.1} parent=1 // pred_check_branch
      %759 = sbr.rel (0) target = $region21
    $region20: #{embedding_lookup.1} parent=1 // pred_region
      %s761 = ssub.s32 256, 256
      %762 = vsyncadd [#allocation4], %s761
      %s763 = sshll.u32 [#allocation5], 4
      %s764 = int_to_ptr.vmem [resolvable:$true] %s763
      %769 = dma.vmem_to_hbm [thread:$0]  %s764, 256, %s3, [#allocation4], 128, 128, 8
    $region21: #{embedding_lookup.1} parent=1 // pred_fallthru
      _
    // Predicated region
    $region22: #{embedding_lookup.1} parent=1 // pred_check
      _
    $region23: #{embedding_lookup.1} parent=1 // pred_check_branch
      %771 = sbr.rel (0) target = $region25
    $region24: #{embedding_lookup.1} parent=1 // pred_region
      %772 = dma.done [#allocation4], 256
    $region25: #{embedding_lookup.1} parent=1 // pred_fallthru
      _
    %773 = vsyncpa [#allocation3], 1
    %774 = vsyncpa [#allocation4], 1

</llo_original>
